<compile_context>
chip_gen: v7x
topology: tpu7x:2x2x1
jax: 0.10.0
libtpu: 0.0.40
codegen_flags: <defaults>
</compile_context>

<pallas_src>
import functools

import jax
import jax.numpy as jnp
import numpy as np
from jax import lax
from jax.experimental import pallas as pl
from jax.experimental.pallas import tpu as pltpu


def _self_attn_kernel(qT_ref, k_ref, vT_ref, xT_ref, scal_ref,
                      out_ref, attn_ref, *, n_real):
    # qT_ref  : (1, TQ, 1)     query column for this query tile
    # k_ref   : (1, 1, Npad)   key row for this batch (resident across q tiles)
    # vT_ref  : (1, Npad, C)   value in (N, C) layout (resident across q tiles)
    # xT_ref  : (1, TQ, C)     residual input slice in (N, C) layout
    # scal_ref: (1,) SMEM      sigma * gamma
    # out_ref : (1, TQ, C)     blended output, (N, C) layout
    # attn_ref: (1, TQ, Npad)  attention rows for this query tile
    qT = qT_ref[0]                                   # (TQ, 1)
    k = k_ref[0]                                     # (1, Npad)
    sg = scal_ref[0]
    n_pad = k.shape[-1]

    # Exact analytic row max of the rank-1 energy q_i * k_j:
    #   rowmax_i = q_i * kmax  if q_i >= 0 else  q_i * kmin
    # (k is edge-padded in the wrapper, so max/min over the padded row are exact.)
    kmax = jnp.max(k, axis=-1, keepdims=True)        # (1, 1)
    kmin = jnp.min(k, axis=-1, keepdims=True)        # (1, 1)
    row_max = jnp.where(qT >= 0.0, qT * kmax, qT * kmin)          # (TQ, 1)

    e = jnp.exp(qT * k - row_max)                    # (TQ, Npad) outer product + exp
    if n_pad != n_real:                              # static: mask padded key columns
        col = lax.broadcasted_iota(jnp.int32, (1, n_pad), 1)
        e = jnp.where(col < n_real, e, 0.0)

    # Stage un-normalized weights in the attention output buffer (cuts the number
    # of live (TQ, Npad) f32 temporaries), normalize in place, reuse for the matmul.
    attn_ref[0] = e
    denom = jnp.sum(attn_ref[0], axis=-1, keepdims=True)          # (TQ, 1)
    attn = attn_ref[0] * pl.reciprocal(denom, approx=False)
    attn_ref[0] = attn

    # out_sa^T tile: (TQ, Npad) @ (Npad, C) -> (TQ, C); no in-kernel transposes.
    out_saT = jnp.dot(attn, vT_ref[0], preferred_element_type=jnp.float32)

    # Fused blend: sigma*(gamma*out_sa + x) + (1-sigma)*x == (sigma*gamma)*out_sa + x
    out_ref[0] = (sg * out_saT + xT_ref[0]).astype(out_ref.dtype)


def _vmem_capacity_bytes():
    try:
        return int(pltpu.get_tpu_info().vmem_capacity_bytes)
    except Exception:
        return 64 * 1024 * 1024            # conservative fallback (v7x per-TC VMEM)


def _pick_tile(n_pad, vmem_cap):
    # v5e/v6e (128 MiB VMEM, HBM-writeback bound): big query tiles.
    # v7x (64 MiB VMEM per TC): keep TQ = 128.
    target = 512 if vmem_cap >= 100 * 1024 * 1024 else 128
    tq = 128
    for cand in (512, 256, 128):
        if cand <= target and cand <= n_pad and n_pad % cand == 0:
            tq = cand
            break
    # Shrink while the double-buffered attention tile would eat too much VMEM.
    while tq > 128 and 2 * tq * n_pad * 4 > int(0.4 * vmem_cap):
        tq //= 2
    return tq


@functools.partial(jax.jit, static_argnames=("tq", "n_pad", "vmem_limit"))
def _self_attn_flat(xf, wq_v, bq_s, wk_v, bk_s, wv_m, bv_v, sg,
                    *, tq, n_pad, vmem_limit):
    B, C, N = xf.shape

    # ---- q-invariant precompute (tiny 1x1 convs + layout), hoisted out of the kernel
    q = jnp.einsum('c,bcn->bn', wq_v, xf) + bq_s                  # (B, N)
    k = jnp.einsum('c,bcn->bn', wk_v, xf) + bk_s                  # (B, N)
    vT = jnp.einsum('bcn,dc->bnd', xf, wv_m) + bv_v               # (B, N, C)
    xT = jnp.transpose(xf, (0, 2, 1))                             # (B, N, C)

    pad = n_pad - N
    if pad:
        q = jnp.pad(q, ((0, 0), (0, pad)))
        k = jnp.pad(k, ((0, 0), (0, pad)), mode='edge')           # keeps max/min exact
        vT = jnp.pad(vT, ((0, 0), (0, pad), (0, 0)))
        xT = jnp.pad(xT, ((0, 0), (0, pad), (0, 0)))

    qT = q.reshape(B, n_pad, 1)
    k3 = k.reshape(B, 1, n_pad)
    scal = sg.reshape(1)

    n_q_tiles = n_pad // tq
    kernel = functools.partial(_self_attn_kernel, n_real=N)

    out_nc, attn = pl.pallas_call(
        kernel,
        out_shape=(
            jax.ShapeDtypeStruct((B, n_pad, C), jnp.float32),
            jax.ShapeDtypeStruct((B, n_pad, n_pad), jnp.float32),
        ),
        grid=(B, n_q_tiles),
        in_specs=[
            pl.BlockSpec((1, tq, 1), lambda b, i: (b, i, 0)),       # qT (per tile)
            pl.BlockSpec((1, 1, n_pad), lambda b, i: (b, 0, 0)),    # k   (resident over i)
            pl.BlockSpec((1, n_pad, C), lambda b, i: (b, 0, 0)),    # v^T (resident over i)
            pl.BlockSpec((1, tq, C), lambda b, i: (b, i, 0)),       # x^T (per tile)
            pl.BlockSpec(memory_space=pltpu.MemorySpace.SMEM),      # sigma*gamma
        ],
        out_specs=(
            pl.BlockSpec((1, tq, C), lambda b, i: (b, i, 0)),       # out, (N, C) layout
            pl.BlockSpec((1, tq, n_pad), lambda b, i: (b, i, 0)),   # attention rows
        ),
        compiler_params=pltpu.CompilerParams(
            dimension_semantics=("parallel", "parallel"),
            vmem_limit_bytes=vmem_limit,
        ),
    )(qT, k3, vT, xT, scal)

    out_flat = jnp.transpose(out_nc[:, :N, :], (0, 2, 1))           # (B, C, N)
    attention = attn[:, :N, :N]                                     # (B, N, N)
    return out_flat, attention


def self_attn_generator(x, wq, bq, wk, bk, wv, bv, gamma, sigma):
    """x: (B, C, W, H) float32. Returns (out (B,C,W,H), attention (B,N,N))."""
    B, C, W, H = x.shape
    N = W * H
    n_pad = max(128, ((N + 127) // 128) * 128)

    vmem_cap = _vmem_capacity_bytes()
    tq = _pick_tile(n_pad, vmem_cap)

    # VMEM budget: double-buffered attn/out/qT/xT tiles + resident k/vT + headroom.
    need = 4 * (2 * tq * n_pad + 2 * tq * C + 2 * tq * (1 + C)
                + 2 * (n_pad + n_pad * C))
    vmem_limit = int(min(0.7 * vmem_cap, max(4 * need, 32 * 1024 * 1024)))

    xf = x.reshape(B, C, N).astype(jnp.float32)
    wq_v = jnp.asarray(wq, jnp.float32).reshape(C)
    wk_v = jnp.asarray(wk, jnp.float32).reshape(C)
    wv_m = jnp.asarray(wv, jnp.float32).reshape(C, C)
    bq_s = jnp.asarray(bq, jnp.float32).reshape(())
    bk_s = jnp.asarray(bk, jnp.float32).reshape(())
    bv_v = jnp.asarray(bv, jnp.float32).reshape(1, 1, C)
    sg = (jnp.asarray(sigma, jnp.float32).reshape(()) *
          jnp.asarray(gamma, jnp.float32).reshape(()))

    out_flat, attention = _self_attn_flat(
        xf, wq_v, bq_s, wk_v, bk_s, wv_m, bv_v, sg,
        tq=tq, n_pad=n_pad, vmem_limit=vmem_limit)

    return out_flat.reshape(B, C, W, H), attention


def _reference(x, wq, bq, wk, bk, wv, bv, gamma, sigma):
    """Pure-JAX reference mirroring the PyTorch forward exactly."""
    B, C, W, H = x.shape
    N = W * H
    xf = x.reshape(B, C, N)
    q = jnp.einsum('oc,bcn->bon', wq, xf) + bq.reshape(1, 1, 1)     # (B, 1, N)
    k = jnp.einsum('oc,bcn->bon', wk, xf) + bk.reshape(1, 1, 1)     # (B, 1, N)
    v = jnp.einsum('oc,bcn->bon', wv, xf) + bv.reshape(1, C, 1)     # (B, C, N)
    energy = jnp.einsum('bon,bom->bnm', q, k)                       # (B, N, N)
    attn = jax.nn.softmax(energy, axis=-1)
    out_sa = jnp.einsum('bcn,bmn->bcm', v, attn)                    # (B, C, N)
    out_base = gamma * out_sa + xf
    out = sigma * out_base + (1.0 - sigma) * xf
    return out.reshape(B, C, W, H), attn


if __name__ == "__main__":
    key = jax.random.PRNGKey(0)
    B, C, W, H = 2, 4, 16, 16

    k_x, k_wq, k_bq, k_wk, k_bk, k_wv, k_bv = jax.random.split(key, 7)

    x = jax.random.normal(k_x, (B, C, W, H), dtype=jnp.float32)

    # Deterministic parameter init (kaiming-uniform-ish for 1x1 convs).
    bound = 1.0 / np.sqrt(C)
    wq = jax.random.uniform(k_wq, (1, C), jnp.float32, -bound, bound)
    bq = jax.random.uniform(k_bq, (1,), jnp.float32, -bound, bound)
    wk = jax.random.uniform(k_wk, (1, C), jnp.float32, -bound, bound)
    bk = jax.random.uniform(k_bk, (1,), jnp.float32, -bound, bound)
    wv = jax.random.uniform(k_wv, (C, C), jnp.float32, -bound, bound)
    bv = jax.random.uniform(k_bv, (C,), jnp.float32, -bound, bound)

    # Case 1: module init values (gamma = 0 parameter, sigma = 0).
    gamma0 = jnp.zeros((1,), jnp.float32)
    sigma0 = jnp.float32(0.0)
    out, attn = self_attn_generator(x, wq, bq, wk, bk, wv, bv, gamma0, sigma0)
    out = jax.block_until_ready(out)
    attn = jax.block_until_ready(attn)
    out_ref, attn_ref = _reference(x, wq, bq, wk, bk, wv, bv, gamma0, sigma0)
    np.testing.assert_allclose(np.asarray(out), np.asarray(out_ref), rtol=1e-5, atol=1e-5)
    np.testing.assert_allclose(np.asarray(attn), np.asarray(attn_ref), rtol=1e-5, atol=1e-5)

    # Case 2: non-trivial gamma / sigma (post-training + update_sigma) to exercise
    # the fused blend path.
    gamma1 = jnp.full((1,), 0.7, jnp.float32)
    sigma1 = jnp.float32(0.3)
    out, attn = self_attn_generator(x, wq, bq, wk, bk, wv, bv, gamma1, sigma1)
    out = jax.block_until_ready(out)
    attn = jax.block_until_ready(attn)
    out_ref, attn_ref = _reference(x, wq, bq, wk, bk, wv, bv, gamma1, sigma1)
    np.testing.assert_allclose(np.asarray(out), np.asarray(out_ref), rtol=1e-5, atol=1e-5)
    np.testing.assert_allclose(np.asarray(attn), np.asarray(attn_ref), rtol=1e-5, atol=1e-5)

    print("KERNEL_OK")
</pallas_src>

<mosaic_0001>
module attributes {stable_mosaic.version = 11 : i64} {
  func.func @_self_attn_kernel(%arg0: i32, %arg1: i32, %arg2: memref<1x128x1xf32, #tpu.memory_space<vmem>>, %arg3: memref<1x1x256xf32, #tpu.memory_space<vmem>>, %arg4: memref<1x256x4xf32, #tpu.memory_space<vmem>>, %arg5: memref<1x128x4xf32, #tpu.memory_space<vmem>>, %arg6: memref<1xf32, #tpu.memory_space<smem>>, %arg7: memref<1x128x4xf32, #tpu.memory_space<vmem>>, %arg8: memref<1x128x256xf32, #tpu.memory_space<vmem>>) attributes {dimension_semantics = [#tpu.dimension_semantics<parallel>, #tpu.dimension_semantics<parallel>], iteration_bounds = array<i64: 2, 2>, scalar_prefetch = 0 : i64, scratch_operands = 0 : i64, tpu.core_type = #tpu.core_type<tc>, window_params = [{transform_indices = @transform_0, window_bounds = array<i64: 1, 128, 1>}, {transform_indices = @transform_1, window_bounds = array<i64: 1, 1, 256>}, {transform_indices = @transform_2, window_bounds = array<i64: 1, 256, 4>}, {transform_indices = @transform_3, window_bounds = array<i64: 1, 128, 4>}, {transform_indices = @transform_4, window_bounds = array<i64: 1>}, {transform_indices = @transform_5, window_bounds = array<i64: 1, 128, 4>}, {transform_indices = @transform_6, window_bounds = array<i64: 1, 128, 256>}]} {
    %c0 = arith.constant 0 : index
    %c0_0 = arith.constant 0 : index
    %c0_1 = arith.constant 0 : index
    %0 = vector.load %arg2[%c0, %c0_0, %c0_1] : memref<1x128x1xf32, #tpu.memory_space<vmem>>, vector<1x128x1xf32>
    %1 = vector.shape_cast %0 : vector<1x128x1xf32> to vector<128x1xf32>
    %c0_2 = arith.constant 0 : index
    %c0_3 = arith.constant 0 : index
    %c0_4 = arith.constant 0 : index
    %2 = vector.load %arg3[%c0_2, %c0_3, %c0_4] : memref<1x1x256xf32, #tpu.memory_space<vmem>>, vector<1x1x256xf32>
    %3 = vector.shape_cast %2 : vector<1x1x256xf32> to vector<1x256xf32>
    %c0_5 = arith.constant 0 : index
    %4 = memref.load %arg6[%c0_5] : memref<1xf32, #tpu.memory_space<smem>>
    %cst = arith.constant dense<0xFF800000> : vector<1xf32>
    %5 = vector.multi_reduction <maximumf>, %3, %cst [1] : vector<1x256xf32> to vector<1xf32>
    %6 = vector.shape_cast %5 : vector<1xf32> to vector<1x1xf32>
    %cst_6 = arith.constant dense<0x7F800000> : vector<1xf32>
    %7 = vector.multi_reduction <minimumf>, %3, %cst_6 [1] : vector<1x256xf32> to vector<1xf32>
    %8 = vector.shape_cast %7 : vector<1xf32> to vector<1x1xf32>
    %cst_7 = arith.constant 0.000000e+00 : f32
    %9 = vector.broadcast %cst_7 : f32 to vector<128x1xf32>
    %10 = arith.cmpf oge, %1, %9 : vector<128x1xf32>
    %11 = vector.broadcast %6 : vector<1x1xf32> to vector<128x1xf32>
    %12 = arith.mulf %1, %11 : vector<128x1xf32>
    %13 = vector.broadcast %8 : vector<1x1xf32> to vector<128x1xf32>
    %14 = arith.mulf %1, %13 : vector<128x1xf32>
    %15 = arith.select %10, %12, %14 : vector<128x1xi1>, vector<128x1xf32>
    %16 = vector.broadcast %1 : vector<128x1xf32> to vector<128x256xf32>
    %17 = vector.broadcast %3 : vector<1x256xf32> to vector<128x256xf32>
    %18 = arith.mulf %16, %17 : vector<128x256xf32>
    %19 = vector.broadcast %15 : vector<128x1xf32> to vector<128x256xf32>
    %20 = arith.subf %18, %19 : vector<128x256xf32>
    %21 = math.exp %20 : vector<128x256xf32>
    %c0_8 = arith.constant 0 : index
    %c0_9 = arith.constant 0 : index
    %c0_10 = arith.constant 0 : index
    %22 = vector.load %arg8[%c0_8, %c0_9, %c0_10] : memref<1x128x256xf32, #tpu.memory_space<vmem>>, vector<1x128x256xf32>
    %23 = vector.shape_cast %22 : vector<1x128x256xf32> to vector<128x256xf32>
    %24 = vector.shape_cast %21 : vector<128x256xf32> to vector<1x128x256xf32>
    tpu.vector_store %arg8[%c0_8, %c0_9, %c0_10], %24 {strides = array<i32>} : memref<1x128x256xf32, #tpu.memory_space<vmem>>, vector<1x128x256xf32>,
    %c0_11 = arith.constant 0 : index
    %c0_12 = arith.constant 0 : index
    %c0_13 = arith.constant 0 : index
    %25 = vector.load %arg8[%c0_11, %c0_12, %c0_13] : memref<1x128x256xf32, #tpu.memory_space<vmem>>, vector<1x128x256xf32>
    %26 = vector.shape_cast %25 : vector<1x128x256xf32> to vector<128x256xf32>
    %cst_14 = arith.constant dense<0.000000e+00> : vector<128xf32>
    %27 = vector.multi_reduction <add>, %26, %cst_14 [1] : vector<128x256xf32> to vector<128xf32>
    %28 = vector.shape_cast %27 : vector<128xf32> to vector<128x1xf32>
    %c0_15 = arith.constant 0 : index
    %c0_16 = arith.constant 0 : index
    %c0_17 = arith.constant 0 : index
    %29 = vector.load %arg8[%c0_15, %c0_16, %c0_17] : memref<1x128x256xf32, #tpu.memory_space<vmem>>, vector<1x128x256xf32>
    %30 = vector.shape_cast %29 : vector<1x128x256xf32> to vector<128x256xf32>
    %31 = tpu.reciprocal %28 : vector<128x1xf32> -> vector<128x1xf32>
    %32 = vector.broadcast %31 : vector<128x1xf32> to vector<128x256xf32>
    %33 = arith.mulf %30, %32 : vector<128x256xf32>
    %c0_18 = arith.constant 0 : index
    %c0_19 = arith.constant 0 : index
    %c0_20 = arith.constant 0 : index
    %34 = vector.load %arg8[%c0_18, %c0_19, %c0_20] : memref<1x128x256xf32, #tpu.memory_space<vmem>>, vector<1x128x256xf32>
    %35 = vector.shape_cast %34 : vector<1x128x256xf32> to vector<128x256xf32>
    %36 = vector.shape_cast %33 : vector<128x256xf32> to vector<1x128x256xf32>
    tpu.vector_store %arg8[%c0_18, %c0_19, %c0_20], %36 {strides = array<i32>} : memref<1x128x256xf32, #tpu.memory_space<vmem>>, vector<1x128x256xf32>,
    %c0_21 = arith.constant 0 : index
    %c0_22 = arith.constant 0 : index
    %c0_23 = arith.constant 0 : index
    %37 = vector.load %arg4[%c0_21, %c0_22, %c0_23] : memref<1x256x4xf32, #tpu.memory_space<vmem>>, vector<1x256x4xf32>
    %38 = vector.shape_cast %37 : vector<1x256x4xf32> to vector<256x4xf32>
    %cst_24 = arith.constant dense<0.000000e+00> : vector<128x4xf32>
    %39 = tpu.matmul %33, %38, %cst_24 {dimension_numbers = #tpu.dot_dimension_numbers<[1], [0], [0], [1], [0, 0, 1, 1], [], []>} : vector<128x256xf32>, vector<256x4xf32>, vector<128x4xf32> -> vector<128x4xf32>
    %40 = vector.broadcast %4 : f32 to vector<128x4xf32>
    %41 = arith.mulf %40, %39 : vector<128x4xf32>
    %c0_25 = arith.constant 0 : index
    %c0_26 = arith.constant 0 : index
    %c0_27 = arith.constant 0 : index
    %42 = vector.load %arg5[%c0_25, %c0_26, %c0_27] : memref<1x128x4xf32, #tpu.memory_space<vmem>>, vector<1x128x4xf32>
    %43 = vector.shape_cast %42 : vector<1x128x4xf32> to vector<128x4xf32>
    %44 = arith.addf %41, %43 : vector<128x4xf32>
    %c0_28 = arith.constant 0 : index
    %c0_29 = arith.constant 0 : index
    %c0_30 = arith.constant 0 : index
    %45 = vector.load %arg7[%c0_28, %c0_29, %c0_30] : memref<1x128x4xf32, #tpu.memory_space<vmem>>, vector<1x128x4xf32>
    %46 = vector.shape_cast %45 : vector<1x128x4xf32> to vector<128x4xf32>
    %47 = vector.shape_cast %44 : vector<128x4xf32> to vector<1x128x4xf32>
    tpu.vector_store %arg7[%c0_28, %c0_29, %c0_30], %47 {strides = array<i32>} : memref<1x128x4xf32, #tpu.memory_space<vmem>>, vector<1x128x4xf32>,
    return
  }
  func.func @transform_0(%arg0: i32, %arg1: i32) -> (i32, i32, i32) {
    %c0_i32 = arith.constant 0 : i32
    %c0_i32_0 = arith.constant 0 : i32
    return %arg0, %arg1, %c0_i32 : i32, i32, i32
  }
  func.func @transform_1(%arg0: i32, %arg1: i32) -> (i32, i32, i32) {
    %c0_i32 = arith.constant 0 : i32
    %c0_i32_0 = arith.constant 0 : i32
    %c0_i32_1 = arith.constant 0 : i32
    return %arg0, %c0_i32, %c0_i32_0 : i32, i32, i32
  }
  func.func @transform_2(%arg0: i32, %arg1: i32) -> (i32, i32, i32) {
    %c0_i32 = arith.constant 0 : i32
    %c0_i32_0 = arith.constant 0 : i32
    %c0_i32_1 = arith.constant 0 : i32
    return %arg0, %c0_i32, %c0_i32_0 : i32, i32, i32
  }
  func.func @transform_3(%arg0: i32, %arg1: i32) -> (i32, i32, i32) {
    %c0_i32 = arith.constant 0 : i32
    %c0_i32_0 = arith.constant 0 : i32
    return %arg0, %arg1, %c0_i32 : i32, i32, i32
  }
  func.func @transform_4(%arg0: i32, %arg1: i32) -> i32 {
    %c0_i32 = arith.constant 0 : i32
    %c0_i32_0 = arith.constant 0 : i32
    return %c0_i32 : i32
  }
  func.func @transform_5(%arg0: i32, %arg1: i32) -> (i32, i32, i32) {
    %c0_i32 = arith.constant 0 : i32
    %c0_i32_0 = arith.constant 0 : i32
    return %arg0, %arg1, %c0_i32 : i32, i32, i32
  }
  func.func @transform_6(%arg0: i32, %arg1: i32) -> (i32, i32, i32) {
    %c0_i32 = arith.constant 0 : i32
    %c0_i32_0 = arith.constant 0 : i32
    return %arg0, %arg1, %c0_i32 : i32, i32, i32
  }
}

</mosaic_0001>

<llo_original>
// kernel: _self_attn_flat.1
$region0: #{_self_attn_flat.1}
  #allocation0 [shape = 'u32[]', space=smem, size = 0x4, offset = 0x4, fixed_abs, tag = 'smem constant byte address 0x4 - core index']
  #allocation1 [shape = 'u32[144,128]{1,0:T(1,128)}', space=vmem, size = 0x12000, scoped, tag = 'internal scratch']
  #allocation2 [shape = 'f32[1]{0:T(128)S(6)}', space=smem, size = 0x200, scoped, tag = 'scoped memory for _self_attn_flat.1']
  %s0 = inlined_call_operand.vmem [shape: f32[2,256,1], index: 0, kind: input, shape index: {}]
  %s1 = inlined_call_operand.vmem [shape: f32[2,1,256], index: 1, kind: input, shape index: {}]
  %s2 = inlined_call_operand.vmem [shape: f32[2,256,4], index: 2, kind: input, shape index: {}]
  %s3 = inlined_call_operand.vmem [shape: f32[2,256,4], index: 3, kind: input, shape index: {}]
  %s4 = inlined_call_operand.<no memory space> [shape: f32[1], index: 4, kind: input, shape index: {}]
  %s5 = inlined_call_operand.vmem [shape: f32[2,256,4], index: 5, kind: output, shape index: {0}]
  %s6 = inlined_call_operand.hbm [shape: f32[2,256,256], index: 6, kind: output, shape index: {1}]
  %7 = xla_tuple %s5, %s6
  %s8 = sld [smem:[#allocation0]]
  $region61: #{_self_attn_flat.1} parent=0
    _
  %s10 = ssub.s32 1, %s8
  %s11 = scalar_select 0, %s10, %s8
  %12 = sst [smem:[#allocation2]] %s4
  $region1: #{_self_attn_flat.1} parent=0
    #allocation3 [shape = 'u8[262144]{0}', space=vmem, size = 0x40000, scoped, tag = 'output window, operand 1']
    #allocation4 [shape = 's32[2]{0}', space=sflag, size = 0x8, scoped, tag = 'scoped memory for _self_attn_flat.1']
    %13 = vsyncpa [#allocation4], 0
    %s14 = scalar_lea.sflag [#allocation4], 1
    %15 = vsyncpa %s14, 0
    loop: start=0, step=1, limit=6
    $region2: #{_self_attn_flat.1} parent=1 // loop_pre_header
      _
    $region3: #{_self_attn_flat.1} parent=1 // loop_header
      %s17 = sphi 0, %s21
      %p18 = scmp.ge.s32.totalorder %s17, 6
      %s24 = sphi 0, %s36
      %s25 = sphi 0, %s32
      %s26 = sphi 0, %s24
      %s27 = sphi 0, %s25
      %s28 = sphi 0, %s26
      %s29 = sphi 0, %s27
      %s41 = sphi 0, %s43
      %s44 = sphi 0, %s41
      %s45 = sphi 0, %s44
      %s61 = sphi 0, %s45
      %s67 = sphi 0, %s69
      %s70 = sphi 0, %s67
      %s71 = sphi 0, %s70
      %s87 = sphi 0, %s71
      %s93 = sphi 0, %s95
      %s96 = sphi 0, %s93
      %s97 = sphi 0, %s96
      %s113 = sphi 0, %s97
      %s121 = sphi 0, %s123
      %s124 = sphi 0, %s121
      %s125 = sphi 0, %s124
      %s141 = sphi 0, %s125
      %s145 = sphi 0, %s145
      %s147 = sphi 0, %s145
      %s148 = sphi 0, %s147
      %s162 = sphi 0, %s148
      %s170 = sphi 0, %s172
      %s173 = sphi 0, %s170
      %s174 = sphi 0, %s173
      %s190 = sphi 0, %s174
      %s198 = sphi 0, %s200
      %s201 = sphi 0, %s198
      %s202 = sphi 0, %s201
      %s218 = sphi 0, %s202
    $region4: #{_self_attn_flat.1} parent=1 // loop_header_branch
      %20 = sbr.rel (%p18) target = $region8
    $region5: #{_self_attn_flat.1} parent=1 // loop_body
      %s22 = ssub.s32 %s17, 1
      %s23 = ssub.s32 %s17, 2
      %s30 = sadd.s32 1, %s25
      %p31 = scmp.ge.s32.totalorder %s30, 2
      %s32 = scalar_select %p31, 0, %s30
      %s33 = sadd.s32 1, %s24
      %s34 = scalar_select %p31, %s33, %s24
      %p35 = scmp.ge.s32.totalorder %s34, 2
      %s36 = scalar_select %p35, 0, %s34
      %s37 = ssub.s32 %s24, %s36
      %s38 = ssub.s32 %s25, %s32
      %s39 = sor.u32 %s37, %s38
      %p40 = scmp.eq.s32.totalorder %s39, 0
      %s42 = sadd.s32 %s41, 1
      %s43 = scalar_select %p40, %s41, %s42
      %p46 = pneg %p40
      %p47 = scmp.eq.s32.totalorder %s17, 3
      %p48 = por %p46, %p47
      %p49 = scmp.ne.s32.totalorder %s41, %s44
      %p50 = scmp.eq.s32.totalorder %s17, 0
      %p51 = por %p49, %p50
      %p52 = scmp.ne.s32.totalorder %s41, %s44
      %p53 = scmp.eq.s32.totalorder %s22, 3
      %p54 = por %p52, %p53
      %p55 = scmp.ne.s32.totalorder %s44, %s45
      %p56 = scmp.eq.s32.totalorder %s22, 0
      %p57 = por %p55, %p56
      %p58 = scmp.ne.s32.totalorder %s44, %s45
      %p59 = scmp.eq.s32.totalorder %s23, 3
      %p60 = por %p58, %p59
      %p62 = scmp.ne.s32.totalorder %s45, %s61
      %p63 = scmp.eq.s32.totalorder %s23, 0
      %p64 = por %p62, %p63
      %s65 = ssub.s32 %s24, %s36
      %p66 = scmp.eq.s32.totalorder %s65, 0
      %s68 = sadd.s32 %s67, 1
      %s69 = scalar_select %p66, %s67, %s68
      %p72 = pneg %p66
      %p73 = scmp.eq.s32.totalorder %s17, 3
      %p74 = por %p72, %p73
      %p75 = scmp.ne.s32.totalorder %s67, %s70
      %p76 = scmp.eq.s32.totalorder %s17, 0
      %p77 = por %p75, %p76
      %p78 = scmp.ne.s32.totalorder %s67, %s70
      %p79 = scmp.eq.s32.totalorder %s22, 3
      %p80 = por %p78, %p79
      %p81 = scmp.ne.s32.totalorder %s70, %s71
      %p82 = scmp.eq.s32.totalorder %s22, 0
      %p83 = por %p81, %p82
      %p84 = scmp.ne.s32.totalorder %s70, %s71
      %p85 = scmp.eq.s32.totalorder %s23, 3
      %p86 = por %p84, %p85
      %p88 = scmp.ne.s32.totalorder %s71, %s87
      %p89 = scmp.eq.s32.totalorder %s23, 0
      %p90 = por %p88, %p89
      %s91 = ssub.s32 %s24, %s36
      %p92 = scmp.eq.s32.totalorder %s91, 0
      %s94 = sadd.s32 %s93, 1
      %s95 = scalar_select %p92, %s93, %s94
      %p98 = pneg %p92
      %p99 = scmp.eq.s32.totalorder %s17, 3
      %p100 = por %p98, %p99
      %p101 = scmp.ne.s32.totalorder %s93, %s96
      %p102 = scmp.eq.s32.totalorder %s17, 0
      %p103 = por %p101, %p102
      %p104 = scmp.ne.s32.totalorder %s93, %s96
      %p105 = scmp.eq.s32.totalorder %s22, 3
      %p106 = por %p104, %p105
      %p107 = scmp.ne.s32.totalorder %s96, %s97
      %p108 = scmp.eq.s32.totalorder %s22, 0
      %p109 = por %p107, %p108
      %p110 = scmp.ne.s32.totalorder %s96, %s97
      %p111 = scmp.eq.s32.totalorder %s23, 3
      %p112 = por %p110, %p111
      %p114 = scmp.ne.s32.totalorder %s97, %s113
      %p115 = scmp.eq.s32.totalorder %s23, 0
      %p116 = por %p114, %p115
      %s117 = ssub.s32 %s24, %s36
      %s118 = ssub.s32 %s25, %s32
      %s119 = sor.u32 %s117, %s118
      %p120 = scmp.eq.s32.totalorder %s119, 0
      %s122 = sadd.s32 %s121, 1
      %s123 = scalar_select %p120, %s121, %s122
      %p126 = pneg %p120
      %p127 = scmp.eq.s32.totalorder %s17, 3
      %p128 = por %p126, %p127
      %p129 = scmp.ne.s32.totalorder %s121, %s124
      %p130 = scmp.eq.s32.totalorder %s17, 0
      %p131 = por %p129, %p130
      %p132 = scmp.ne.s32.totalorder %s121, %s124
      %p133 = scmp.eq.s32.totalorder %s22, 3
      %p134 = por %p132, %p133
      %p135 = scmp.ne.s32.totalorder %s124, %s125
      %p136 = scmp.eq.s32.totalorder %s22, 0
      %p137 = por %p135, %p136
      %p138 = scmp.ne.s32.totalorder %s124, %s125
      %p139 = scmp.eq.s32.totalorder %s23, 3
      %p140 = por %p138, %p139
      %p142 = scmp.ne.s32.totalorder %s125, %s141
      %p143 = scmp.eq.s32.totalorder %s23, 0
      %p144 = por %p142, %p143
      %s146 = sadd.s32 %s145, 1
      %p149 = scmp.eq.s32.totalorder %s17, 3
      %p150 = scmp.ne.s32.totalorder %s145, %s147
      %p151 = scmp.eq.s32.totalorder %s17, 0
      %p152 = por %p150, %p151
      %p153 = scmp.ne.s32.totalorder %s145, %s147
      %p154 = scmp.eq.s32.totalorder %s22, 3
      %p155 = por %p153, %p154
      %p156 = scmp.ne.s32.totalorder %s147, %s148
      %p157 = scmp.eq.s32.totalorder %s22, 0
      %p158 = por %p156, %p157
      %p159 = scmp.ne.s32.totalorder %s147, %s148
      %p160 = scmp.eq.s32.totalorder %s23, 3
      %p161 = por %p159, %p160
      %p163 = scmp.ne.s32.totalorder %s148, %s162
      %p164 = scmp.eq.s32.totalorder %s23, 0
      %p165 = por %p163, %p164
      %s166 = ssub.s32 %s24, %s36
      %s167 = ssub.s32 %s25, %s32
      %s168 = sor.u32 %s166, %s167
      %p169 = scmp.eq.s32.totalorder %s168, 0
      %s171 = sadd.s32 %s170, 1
      %s172 = scalar_select %p169, %s170, %s171
      %p175 = pneg %p169
      %p176 = scmp.eq.s32.totalorder %s17, 3
      %p177 = por %p175, %p176
      %p178 = scmp.ne.s32.totalorder %s170, %s173
      %p179 = scmp.eq.s32.totalorder %s17, 0
      %p180 = por %p178, %p179
      %p181 = scmp.ne.s32.totalorder %s170, %s173
      %p182 = scmp.eq.s32.totalorder %s22, 3
      %p183 = por %p181, %p182
      %p184 = scmp.ne.s32.totalorder %s173, %s174
      %p185 = scmp.eq.s32.totalorder %s22, 0
      %p186 = por %p184, %p185
      %p187 = scmp.ne.s32.totalorder %s173, %s174
      %p188 = scmp.eq.s32.totalorder %s23, 3
      %p189 = por %p187, %p188
      %p191 = scmp.ne.s32.totalorder %s174, %s190
      %p192 = scmp.eq.s32.totalorder %s23, 0
      %p193 = por %p191, %p192
      %s194 = ssub.s32 %s24, %s36
      %s195 = ssub.s32 %s25, %s32
      %s196 = sor.u32 %s194, %s195
      %p197 = scmp.eq.s32.totalorder %s196, 0
      %s199 = sadd.s32 %s198, 1
      %s200 = scalar_select %p197, %s198, %s199
      %p203 = pneg %p197
      %p204 = scmp.eq.s32.totalorder %s17, 3
      %p205 = por %p203, %p204
      %p206 = scmp.ne.s32.totalorder %s198, %s201
      %p207 = scmp.eq.s32.totalorder %s17, 0
      %p208 = por %p206, %p207
      %p209 = scmp.ne.s32.totalorder %s198, %s201
      %p210 = scmp.eq.s32.totalorder %s22, 3
      %p211 = por %p209, %p210
      %p212 = scmp.ne.s32.totalorder %s201, %s202
      %p213 = scmp.eq.s32.totalorder %s22, 0
      %p214 = por %p212, %p213
      %p215 = scmp.ne.s32.totalorder %s201, %s202
      %p216 = scmp.eq.s32.totalorder %s23, 3
      %p217 = por %p215, %p216
      %p219 = scmp.ne.s32.totalorder %s202, %s218
      %p220 = scmp.eq.s32.totalorder %s23, 0
      %p221 = por %p219, %p220
      %p222 = scmp.le.s32.totalorder 1, %s17
      %p223 = scmp.lt.s32.totalorder %s17, 5
      %p224 = pnand %p222, %p223
      %p225 = pneg %p224
      // Predicated region
      $region9: #{_self_attn_flat.1} parent=5 // pred_check
        _
      $region10: #{_self_attn_flat.1} parent=5 // pred_check_branch
        %227 = sbr.rel (%p224) target = $region12
      $region11: #{_self_attn_flat.1} parent=5 // pred_region
        %s228 = ssub.s32 %s17, 1
        // Predicated region
        $region13: #{_self_attn_flat.1} parent=11 // pred_check
          %p229 = pneg %p158
        $region14: #{_self_attn_flat.1} parent=11 // pred_check_branch
          %231 = sbr.rel (%p229) target = $region16
        $region15: #{_self_attn_flat.1} parent=11 // pred_region
          _
        $region16: #{_self_attn_flat.1} parent=11 // pred_fallthru
          _
      $region12: #{_self_attn_flat.1} parent=5 // pred_fallthru
        _
      %p232 = scmp.lt.s32.totalorder %s17, 4
      // Predicated region
      $region17: #{_self_attn_flat.1} parent=5 // pred_check
        %p233 = pneg %p232
      $region18: #{_self_attn_flat.1} parent=5 // pred_check_branch
        %235 = sbr.rel (%p233) target = $region20
      $region19: #{_self_attn_flat.1} parent=5 // pred_region
        // Predicated region
        $region21: #{_self_attn_flat.1} parent=19 // pred_check
          %p236 = pneg %p51
        $region22: #{_self_attn_flat.1} parent=19 // pred_check_branch
          %238 = sbr.rel (%p236) target = $region24
        $region23: #{_self_attn_flat.1} parent=19 // pred_region
          %s239 = smul.u32 16, %s25
          %p240 = scmp.lt.s32.totalorder %s24, 1
          %s241 = scalar_select %p240, %s24, 1
          %p242 = scmp.lt.s32.totalorder %s239, 31
          %s243 = scalar_select %p242, %s239, 31
          %s244 = smul.addr %s241, 32
          %s245 = sadd.s32 %s243, %s244
          %s246 = smul.addr %s245, 8
          %s247 = scalar_lea.vmem %s0, %s246
          %s248 = smul.u32 16, %s25
        $region24: #{_self_attn_flat.1} parent=19 // pred_fallthru
          _
        // Predicated region
        $region25: #{_self_attn_flat.1} parent=19 // pred_check
          %p249 = pneg %p77
        $region26: #{_self_attn_flat.1} parent=19 // pred_check_branch
          %251 = sbr.rel (%p249) target = $region28
        $region27: #{_self_attn_flat.1} parent=19 // pred_region
          %p252 = scmp.lt.s32.totalorder %s24, 1
          %s253 = scalar_select %p252, %s24, 1
          %s254 = smul.addr %s253, 2
          %s255 = scalar_lea.vmem %s1, %s254
        $region28: #{_self_attn_flat.1} parent=19 // pred_fallthru
          _
        // Predicated region
        $region29: #{_self_attn_flat.1} parent=19 // pred_check
          %p256 = pneg %p103
        $region30: #{_self_attn_flat.1} parent=19 // pred_check_branch
          %258 = sbr.rel (%p256) target = $region32
        $region31: #{_self_attn_flat.1} parent=19 // pred_region
          %p259 = scmp.lt.s32.totalorder %s24, 1
          %s260 = scalar_select %p259, %s24, 1
          %s261 = smul.addr %s260, 32
          %s262 = smul.addr %s261, 8
          %s263 = scalar_lea.vmem %s2, %s262
        $region32: #{_self_attn_flat.1} parent=19 // pred_fallthru
          _
        // Predicated region
        $region33: #{_self_attn_flat.1} parent=19 // pred_check
          %p264 = pneg %p131
        $region34: #{_self_attn_flat.1} parent=19 // pred_check_branch
          %266 = sbr.rel (%p264) target = $region36
        $region35: #{_self_attn_flat.1} parent=19 // pred_region
          %s267 = smul.u32 16, %s25
          %p268 = scmp.lt.s32.totalorder %s24, 1
          %s269 = scalar_select %p268, %s24, 1
          %p270 = scmp.lt.s32.totalorder %s267, 31
          %s271 = scalar_select %p270, %s267, 31
          %s272 = smul.addr %s269, 32
          %s273 = sadd.s32 %s271, %s272
          %s274 = smul.addr %s273, 8
          %s275 = scalar_lea.vmem %s3, %s274
          %s276 = smul.u32 16, %s25
        $region36: #{_self_attn_flat.1} parent=19 // pred_fallthru
          _
      $region20: #{_self_attn_flat.1} parent=5 // pred_fallthru
        _
      %p277 = scmp.le.s32.totalorder 1, %s17
      %p278 = scmp.lt.s32.totalorder %s17, 5
      %p279 = pnand %p277, %p278
      %p280 = pneg %p279
      // Predicated region
      $region37: #{_self_attn_flat.1} parent=5 // pred_check
        _
      $region38: #{_self_attn_flat.1} parent=5 // pred_check_branch
        %282 = sbr.rel (%p279) target = $region40
      $region39: #{_self_attn_flat.1} parent=5 // pred_region
        %s283 = ssub.s32 %s17, 1
        %s284 = smul.u32 16, %s27
        %p285 = scmp.lt.s32.totalorder %s26, 1
        %s286 = scalar_select %p285, %s26, 1
        %p287 = scmp.lt.s32.totalorder %s284, 31
        %s288 = scalar_select %p287, %s284, 31
        %s289 = smul.addr %s286, 32
        %s290 = sadd.s32 %s288, %s289
        %s291 = smul.addr %s290, 8
        %s292 = scalar_lea.vmem %s0, %s291
        %p293 = pneg %p57
        %p294 = pneg %p54
        %p295 = scmp.lt.s32.totalorder %s26, 1
        %s296 = scalar_select %p295, %s26, 1
        %s297 = smul.addr %s296, 2
        %s298 = scalar_lea.vmem %s1, %s297
        %p299 = pneg %p83
        %p300 = pneg %p80
        %p301 = scmp.lt.s32.totalorder %s26, 1
        %s302 = scalar_select %p301, %s26, 1
        %s303 = smul.addr %s302, 32
        %s304 = smul.addr %s303, 8
        %s305 = scalar_lea.vmem %s2, %s304
        %p306 = pneg %p109
        %p307 = pneg %p106
        %s308 = smul.u32 16, %s27
        %p309 = scmp.lt.s32.totalorder %s26, 1
        %s310 = scalar_select %p309, %s26, 1
        %p311 = scmp.lt.s32.totalorder %s308, 31
        %s312 = scalar_select %p311, %s308, 31
        %s313 = smul.addr %s310, 32
        %s314 = sadd.s32 %s312, %s313
        %s315 = smul.addr %s314, 8
        %s316 = scalar_lea.vmem %s3, %s315
        %p317 = pneg %p137
        %p318 = pneg %p134
        %p319 = pneg %p158
        %p320 = pneg %p155
        %p321 = pneg %p186
        %p322 = pneg %p183
        %s323 = smul.u32 16, %s27
        %p324 = scmp.lt.s32.totalorder %s26, 1
        %s325 = scalar_select %p324, %s26, 1
        %p326 = scmp.lt.s32.totalorder %s323, 31
        %s327 = scalar_select %p326, %s323, 31
        %s328 = smul.addr %s325, 32
        %s329 = sadd.s32 %s327, %s328
        %s330 = smul.addr %s329, 8
        %s331 = scalar_lea.vmem %s5, %s330
        %p332 = pneg %p214
        %p333 = pneg %p211
        %s334 = sand.u32 %s201, 1
        %s335 = scalar_lea.sflag [#allocation4], %s334
        %s336 = sand.u32 %s201, 1
        %s337 = smul.addr %s336, 256
        %s338 = scalar_lea.vmem [#allocation3], %s337
        %s339 = smul.u32 16, %s27
        %p340 = scmp.lt.s32.totalorder %s26, 1
        %s341 = scalar_select %p340, %s26, 1
        %p342 = scmp.lt.s32.totalorder %s339, 31
        %s343 = scalar_select %p342, %s339, 31
        %s344 = smul.addr %s341, 32
        %s345 = sadd.s32 %s343, %s344
        %s346 = smul.addr %s345, 8
        %s347 = scalar_lea.vmem %s0, %s346
        %s348 = smul.u32 16, %s27
        %p349 = scmp.lt.s32.totalorder %s26, 1
        %s350 = scalar_select %p349, %s26, 1
        %s351 = smul.addr %s350, 2
        %s352 = scalar_lea.vmem %s1, %s351
        %p353 = scmp.lt.s32.totalorder %s26, 1
        %s354 = scalar_select %p353, %s26, 1
        %s355 = smul.addr %s354, 32
        %s356 = smul.addr %s355, 8
        %s357 = scalar_lea.vmem %s2, %s356
        %s358 = smul.u32 16, %s27
        %p359 = scmp.lt.s32.totalorder %s26, 1
        %s360 = scalar_select %p359, %s26, 1
        %p361 = scmp.lt.s32.totalorder %s358, 31
        %s362 = scalar_select %p361, %s358, 31
        %s363 = smul.addr %s360, 32
        %s364 = sadd.s32 %s362, %s363
        %s365 = smul.addr %s364, 8
        %s366 = scalar_lea.vmem %s3, %s365
        %s367 = smul.u32 16, %s27
        %s368 = smul.u32 16, %s27
        %p369 = scmp.lt.s32.totalorder %s26, 1
        %s370 = scalar_select %p369, %s26, 1
        %p371 = scmp.lt.s32.totalorder %s368, 31
        %s372 = scalar_select %p371, %s368, 31
        %s373 = smul.addr %s370, 32
        %s374 = sadd.s32 %s372, %s373
        %s375 = smul.addr %s374, 8
        %s376 = scalar_lea.vmem %s5, %s375
        %s377 = smul.u32 16, %s27
        %s378 = smul.u32 16, %s27
        %v379 = vld [vmem:[%s347] sm:$0xff]
        %v380 = vld [vmem:[%s347 + $0x8] sm:$0xff]
        %v381 = vld [vmem:[%s347 + $0x10] sm:$0xff]
        %v382 = vld [vmem:[%s347 + $0x18] sm:$0xff]
        %v383 = vld [vmem:[%s347 + $0x20] sm:$0xff]
        %v384 = vld [vmem:[%s347 + $0x28] sm:$0xff]
        %v385 = vld [vmem:[%s347 + $0x30] sm:$0xff]
        %v386 = vld [vmem:[%s347 + $0x38] sm:$0xff]
        %v387 = vld [vmem:[%s347 + $0x40] sm:$0xff]
        %v388 = vld [vmem:[%s347 + $0x48] sm:$0xff]
        %v389 = vld [vmem:[%s347 + $0x50] sm:$0xff]
        %v390 = vld [vmem:[%s347 + $0x58] sm:$0xff]
        %v391 = vld [vmem:[%s347 + $0x60] sm:$0xff]
        %v392 = vld [vmem:[%s347 + $0x68] sm:$0xff]
        %v393 = vld [vmem:[%s347 + $0x70] sm:$0xff]
        %v394 = vld [vmem:[%s347 + $0x78] sm:$0xff]
        %v395 = vld [vmem:[%s352] sm:$0x3]
        %s396 = sld [smem:[#allocation2]]
        %v398 = vlaneseq
        %v399 = vshrl.u32 %v398, 7
        %v400 = vsub.s32 0, %v399
        %v401 = vrot.slane %v395, %v400
        %v402 = vlaneseq
        %v403 = vshrl.u32 %v402, 7
        %v404 = vsub.s32 1, %v403
        %v405 = vrot.slane %v395, %v404
        %vm408 = vcmask 1040384
        %v409 = vsel %vm408, %v401, -inf
        %v410 = vsel %vm408, %v405, -inf
        %v411 = vmax.f32 %v409, %v410
        %412 = vmax.xlane.f32.xlu0 %v411
        %v413 = vpop.xlane.xlu0 %412
        %v414 = vsel %vm408, %v401, inf
        %v415 = vsel %vm408, %v405, inf
        %v416 = vmin.f32 %v414, %v415
        %417 = vmin.xlane.f32.xlu0 %v416
        %v418 = vpop.xlane.xlu0 %417
        %vm419 = vcmp.ge.f32.partialorder %v379, 0.0
        %vm420 = vcmp.ge.f32.partialorder %v380, 0.0
        %vm421 = vcmp.ge.f32.partialorder %v381, 0.0
        %vm422 = vcmp.ge.f32.partialorder %v382, 0.0
        %vm423 = vcmp.ge.f32.partialorder %v383, 0.0
        %vm424 = vcmp.ge.f32.partialorder %v384, 0.0
        %vm425 = vcmp.ge.f32.partialorder %v385, 0.0
        %vm426 = vcmp.ge.f32.partialorder %v386, 0.0
        %vm427 = vcmp.ge.f32.partialorder %v387, 0.0
        %vm428 = vcmp.ge.f32.partialorder %v388, 0.0
        %vm429 = vcmp.ge.f32.partialorder %v389, 0.0
        %vm430 = vcmp.ge.f32.partialorder %v390, 0.0
        %vm431 = vcmp.ge.f32.partialorder %v391, 0.0
        %vm432 = vcmp.ge.f32.partialorder %v392, 0.0
        %vm433 = vcmp.ge.f32.partialorder %v393, 0.0
        %vm434 = vcmp.ge.f32.partialorder %v394, 0.0
        %v435 = vlaneseq
        %v436 = vshrl.u32 %v435, 7
        %v437 = vsub.s32 0, %v436
        %v438 = vrot.slane %v413, %v437
        %v439 = vmul.f32 %v379, %v438
        %v440 = vmul.f32 %v380, %v438
        %v441 = vmul.f32 %v381, %v438
        %v442 = vmul.f32 %v382, %v438
        %v443 = vmul.f32 %v383, %v438
        %v444 = vmul.f32 %v384, %v438
        %v445 = vmul.f32 %v385, %v438
        %v446 = vmul.f32 %v386, %v438
        %v447 = vmul.f32 %v387, %v438
        %v448 = vmul.f32 %v388, %v438
        %v449 = vmul.f32 %v389, %v438
        %v450 = vmul.f32 %v390, %v438
        %v451 = vmul.f32 %v391, %v438
        %v452 = vmul.f32 %v392, %v438
        %v453 = vmul.f32 %v393, %v438
        %v454 = vmul.f32 %v394, %v438
        %v455 = vlaneseq
        %v456 = vshrl.u32 %v455, 7
        %v457 = vsub.s32 0, %v456
        %v458 = vrot.slane %v418, %v457
        %v459 = vmul.f32 %v379, %v458
        %v460 = vmul.f32 %v380, %v458
        %v461 = vmul.f32 %v381, %v458
        %v462 = vmul.f32 %v382, %v458
        %v463 = vmul.f32 %v383, %v458
        %v464 = vmul.f32 %v384, %v458
        %v465 = vmul.f32 %v385, %v458
        %v466 = vmul.f32 %v386, %v458
        %v467 = vmul.f32 %v387, %v458
        %v468 = vmul.f32 %v388, %v458
        %v469 = vmul.f32 %v389, %v458
        %v470 = vmul.f32 %v390, %v458
        %v471 = vmul.f32 %v391, %v458
        %v472 = vmul.f32 %v392, %v458
        %v473 = vmul.f32 %v393, %v458
        %v474 = vmul.f32 %v394, %v458
        %v475 = vsel %vm419, %v439, %v459
        %v476 = vsel %vm420, %v440, %v460
        %v477 = vsel %vm421, %v441, %v461
        %v478 = vsel %vm422, %v442, %v462
        %v479 = vsel %vm423, %v443, %v463
        %v480 = vsel %vm424, %v444, %v464
        %v481 = vsel %vm425, %v445, %v465
        %v482 = vsel %vm426, %v446, %v466
        %v483 = vsel %vm427, %v447, %v467
        %v484 = vsel %vm428, %v448, %v468
        %v485 = vsel %vm429, %v449, %v469
        %v486 = vsel %vm430, %v450, %v470
        %v487 = vsel %vm431, %v451, %v471
        %v488 = vsel %vm432, %v452, %v472
        %v489 = vsel %vm433, %v453, %v473
        %v490 = vsel %vm434, %v454, %v474
        %492 = vset.pattern.permute.xlu0 0
        %493 = vperm.xlu0 %492, %v379
        %v494 = vpop.permute.xlu0 %493
        %497 = vset.pattern.permute.xlu0 0
        %498 = vperm.xlu0 %497, %v380
        %v499 = vpop.permute.xlu0 %498
        %502 = vset.pattern.permute.xlu0 0
        %503 = vperm.xlu0 %502, %v381
        %v504 = vpop.permute.xlu0 %503
        %507 = vset.pattern.permute.xlu0 0
        %508 = vperm.xlu0 %507, %v382
        %v509 = vpop.permute.xlu0 %508
        %512 = vset.pattern.permute.xlu0 0
        %513 = vperm.xlu0 %512, %v383
        %v514 = vpop.permute.xlu0 %513
        %517 = vset.pattern.permute.xlu0 0
        %518 = vperm.xlu0 %517, %v384
        %v519 = vpop.permute.xlu0 %518
        %522 = vset.pattern.permute.xlu0 0
        %523 = vperm.xlu0 %522, %v385
        %v524 = vpop.permute.xlu0 %523
        %527 = vset.pattern.permute.xlu0 0
        %528 = vperm.xlu0 %527, %v386
        %v529 = vpop.permute.xlu0 %528
        %532 = vset.pattern.permute.xlu0 0
        %533 = vperm.xlu0 %532, %v387
        %v534 = vpop.permute.xlu0 %533
        %537 = vset.pattern.permute.xlu0 0
        %538 = vperm.xlu0 %537, %v388
        %v539 = vpop.permute.xlu0 %538
        %542 = vset.pattern.permute.xlu0 0
        %543 = vperm.xlu0 %542, %v389
        %v544 = vpop.permute.xlu0 %543
        %547 = vset.pattern.permute.xlu0 0
        %548 = vperm.xlu0 %547, %v390
        %v549 = vpop.permute.xlu0 %548
        %552 = vset.pattern.permute.xlu0 0
        %553 = vperm.xlu0 %552, %v391
        %v554 = vpop.permute.xlu0 %553
        %557 = vset.pattern.permute.xlu0 0
        %558 = vperm.xlu0 %557, %v392
        %v559 = vpop.permute.xlu0 %558
        %562 = vset.pattern.permute.xlu0 0
        %563 = vperm.xlu0 %562, %v393
        %v564 = vpop.permute.xlu0 %563
        %567 = vset.pattern.permute.xlu0 0
        %568 = vperm.xlu0 %567, %v394
        %v569 = vpop.permute.xlu0 %568
        %v571 = vmul.f32 %v494, %v401
        %v572 = vmul.f32 %v494, %v405
        %v573 = vmul.f32 %v499, %v401
        %v574 = vmul.f32 %v499, %v405
        %v575 = vmul.f32 %v504, %v401
        %v576 = vmul.f32 %v504, %v405
        %v577 = vmul.f32 %v509, %v401
        %v578 = vmul.f32 %v509, %v405
        %v579 = vmul.f32 %v514, %v401
        %v580 = vmul.f32 %v514, %v405
        %v581 = vmul.f32 %v519, %v401
        %v582 = vmul.f32 %v519, %v405
        %v583 = vmul.f32 %v524, %v401
        %v584 = vmul.f32 %v524, %v405
        %v585 = vmul.f32 %v529, %v401
        %v586 = vmul.f32 %v529, %v405
        %v587 = vmul.f32 %v534, %v401
        %v588 = vmul.f32 %v534, %v405
        %v589 = vmul.f32 %v539, %v401
        %v590 = vmul.f32 %v539, %v405
        %v591 = vmul.f32 %v544, %v401
        %v592 = vmul.f32 %v544, %v405
        %v593 = vmul.f32 %v549, %v401
        %v594 = vmul.f32 %v549, %v405
        %v595 = vmul.f32 %v554, %v401
        %v596 = vmul.f32 %v554, %v405
        %v597 = vmul.f32 %v559, %v401
        %v598 = vmul.f32 %v559, %v405
        %v599 = vmul.f32 %v564, %v401
        %v600 = vmul.f32 %v564, %v405
        %v601 = vmul.f32 %v569, %v401
        %v602 = vmul.f32 %v569, %v405
        %604 = vset.pattern.permute.xlu0 0
        %605 = vperm.xlu0 %604, %v475
        %v606 = vpop.permute.xlu0 %605
        %609 = vset.pattern.permute.xlu0 0
        %610 = vperm.xlu0 %609, %v476
        %v611 = vpop.permute.xlu0 %610
        %614 = vset.pattern.permute.xlu0 0
        %615 = vperm.xlu0 %614, %v477
        %v616 = vpop.permute.xlu0 %615
        %619 = vset.pattern.permute.xlu0 0
        %620 = vperm.xlu0 %619, %v478
        %v621 = vpop.permute.xlu0 %620
        %624 = vset.pattern.permute.xlu0 0
        %625 = vperm.xlu0 %624, %v479
        %v626 = vpop.permute.xlu0 %625
        %629 = vset.pattern.permute.xlu0 0
        %630 = vperm.xlu0 %629, %v480
        %v631 = vpop.permute.xlu0 %630
        %634 = vset.pattern.permute.xlu0 0
        %635 = vperm.xlu0 %634, %v481
        %v636 = vpop.permute.xlu0 %635
        %639 = vset.pattern.permute.xlu0 0
        %640 = vperm.xlu0 %639, %v482
        %v641 = vpop.permute.xlu0 %640
        %644 = vset.pattern.permute.xlu0 0
        %645 = vperm.xlu0 %644, %v483
        %v646 = vpop.permute.xlu0 %645
        %649 = vset.pattern.permute.xlu0 0
        %650 = vperm.xlu0 %649, %v484
        %v651 = vpop.permute.xlu0 %650
        %654 = vset.pattern.permute.xlu0 0
        %655 = vperm.xlu0 %654, %v485
        %v656 = vpop.permute.xlu0 %655
        %659 = vset.pattern.permute.xlu0 0
        %660 = vperm.xlu0 %659, %v486
        %v661 = vpop.permute.xlu0 %660
        %664 = vset.pattern.permute.xlu0 0
        %665 = vperm.xlu0 %664, %v487
        %v666 = vpop.permute.xlu0 %665
        %669 = vset.pattern.permute.xlu0 0
        %670 = vperm.xlu0 %669, %v488
        %v671 = vpop.permute.xlu0 %670
        %674 = vset.pattern.permute.xlu0 0
        %675 = vperm.xlu0 %674, %v489
        %v676 = vpop.permute.xlu0 %675
        %679 = vset.pattern.permute.xlu0 0
        %680 = vperm.xlu0 %679, %v490
        %v681 = vpop.permute.xlu0 %680
        %v683 = vsub.f32 %v571, %v606
        %v684 = vsub.f32 %v572, %v606
        %v685 = vsub.f32 %v573, %v611
        %v686 = vsub.f32 %v574, %v611
        %v687 = vsub.f32 %v575, %v616
        %v688 = vsub.f32 %v576, %v616
        %v689 = vsub.f32 %v577, %v621
        %v690 = vsub.f32 %v578, %v621
        %v691 = vsub.f32 %v579, %v626
        %v692 = vsub.f32 %v580, %v626
        %v693 = vsub.f32 %v581, %v631
        %v694 = vsub.f32 %v582, %v631
        %v695 = vsub.f32 %v583, %v636
        %v696 = vsub.f32 %v584, %v636
        %v697 = vsub.f32 %v585, %v641
        %v698 = vsub.f32 %v586, %v641
        %v699 = vsub.f32 %v587, %v646
        %v700 = vsub.f32 %v588, %v646
        %v701 = vsub.f32 %v589, %v651
        %v702 = vsub.f32 %v590, %v651
        %v703 = vsub.f32 %v591, %v656
        %v704 = vsub.f32 %v592, %v656
        %v705 = vsub.f32 %v593, %v661
        %v706 = vsub.f32 %v594, %v661
        %v707 = vsub.f32 %v595, %v666
        %v708 = vsub.f32 %v596, %v666
        %v709 = vsub.f32 %v597, %v671
        %v710 = vsub.f32 %v598, %v671
        %v711 = vsub.f32 %v599, %v676
        %v712 = vsub.f32 %v600, %v676
        %v713 = vsub.f32 %v601, %v681
        %v714 = vsub.f32 %v602, %v681
        %v715 = vmul.f32 %v683, 1.442695
        %v716 = vpow.pop %v715
        %v717 = vmul.f32 %v684, 1.442695
        %v718 = vpow.pop %v717
        %v719 = vmul.f32 %v685, 1.442695
        %v720 = vpow.pop %v719
        %v721 = vmul.f32 %v686, 1.442695
        %v722 = vpow.pop %v721
        %v723 = vmul.f32 %v687, 1.442695
        %v724 = vpow.pop %v723
        %v725 = vmul.f32 %v688, 1.442695
        %v726 = vpow.pop %v725
        %v727 = vmul.f32 %v689, 1.442695
        %v728 = vpow.pop %v727
        %v729 = vmul.f32 %v690, 1.442695
        %v730 = vpow.pop %v729
        %v731 = vmul.f32 %v691, 1.442695
        %v732 = vpow.pop %v731
        %v733 = vmul.f32 %v692, 1.442695
        %v734 = vpow.pop %v733
        %v735 = vmul.f32 %v693, 1.442695
        %v736 = vpow.pop %v735
        %v737 = vmul.f32 %v694, 1.442695
        %v738 = vpow.pop %v737
        %v739 = vmul.f32 %v695, 1.442695
        %v740 = vpow.pop %v739
        %v741 = vmul.f32 %v696, 1.442695
        %v742 = vpow.pop %v741
        %v743 = vmul.f32 %v697, 1.442695
        %v744 = vpow.pop %v743
        %v745 = vmul.f32 %v698, 1.442695
        %v746 = vpow.pop %v745
        %v747 = vmul.f32 %v699, 1.442695
        %v748 = vpow.pop %v747
        %v749 = vmul.f32 %v700, 1.442695
        %v750 = vpow.pop %v749
        %v751 = vmul.f32 %v701, 1.442695
        %v752 = vpow.pop %v751
        %v753 = vmul.f32 %v702, 1.442695
        %v754 = vpow.pop %v753
        %v755 = vmul.f32 %v703, 1.442695
        %v756 = vpow.pop %v755
        %v757 = vmul.f32 %v704, 1.442695
        %v758 = vpow.pop %v757
        %v759 = vmul.f32 %v705, 1.442695
        %v760 = vpow.pop %v759
        %v761 = vmul.f32 %v706, 1.442695
        %v762 = vpow.pop %v761
        %v763 = vmul.f32 %v707, 1.442695
        %v764 = vpow.pop %v763
        %v765 = vmul.f32 %v708, 1.442695
        %v766 = vpow.pop %v765
        %v767 = vmul.f32 %v709, 1.442695
        %v768 = vpow.pop %v767
        %v769 = vmul.f32 %v710, 1.442695
        %v770 = vpow.pop %v769
        %v771 = vmul.f32 %v711, 1.442695
        %v772 = vpow.pop %v771
        %v773 = vmul.f32 %v712, 1.442695
        %v774 = vpow.pop %v773
        %v775 = vmul.f32 %v713, 1.442695
        %v776 = vpow.pop %v775
        %v777 = vmul.f32 %v714, 1.442695
        %v778 = vpow.pop %v777
        %779 = vst [vmem:[%s338] sm:$0xff] %v716
        %780 = vst [vmem:[%s338 + $0x8] sm:$0xff] %v718
        %781 = vst [vmem:[%s338 + $0x10] sm:$0xff] %v720
        %782 = vst [vmem:[%s338 + $0x18] sm:$0xff] %v722
        %783 = vst [vmem:[%s338 + $0x20] sm:$0xff] %v724
        %784 = vst [vmem:[%s338 + $0x28] sm:$0xff] %v726
        %785 = vst [vmem:[%s338 + $0x30] sm:$0xff] %v728
        %786 = vst [vmem:[%s338 + $0x38] sm:$0xff] %v730
        %787 = vst [vmem:[%s338 + $0x40] sm:$0xff] %v732
        %788 = vst [vmem:[%s338 + $0x48] sm:$0xff] %v734
        %789 = vst [vmem:[%s338 + $0x50] sm:$0xff] %v736
        %790 = vst [vmem:[%s338 + $0x58] sm:$0xff] %v738
        %791 = vst [vmem:[%s338 + $0x60] sm:$0xff] %v740
        %792 = vst [vmem:[%s338 + $0x68] sm:$0xff] %v742
        %793 = vst [vmem:[%s338 + $0x70] sm:$0xff] %v744
        %794 = vst [vmem:[%s338 + $0x78] sm:$0xff] %v746
        %795 = vst [vmem:[%s338 + $0x80] sm:$0xff] %v748
        %796 = vst [vmem:[%s338 + $0x88] sm:$0xff] %v750
        %797 = vst [vmem:[%s338 + $0x90] sm:$0xff] %v752
        %798 = vst [vmem:[%s338 + $0x98] sm:$0xff] %v754
        %799 = vst [vmem:[%s338 + $0xa0] sm:$0xff] %v756
        %800 = vst [vmem:[%s338 + $0xa8] sm:$0xff] %v758
        %801 = vst [vmem:[%s338 + $0xb0] sm:$0xff] %v760
        %802 = vst [vmem:[%s338 + $0xb8] sm:$0xff] %v762
        %803 = vst [vmem:[%s338 + $0xc0] sm:$0xff] %v764
        %804 = vst [vmem:[%s338 + $0xc8] sm:$0xff] %v766
        %805 = vst [vmem:[%s338 + $0xd0] sm:$0xff] %v768
        %806 = vst [vmem:[%s338 + $0xd8] sm:$0xff] %v770
        %807 = vst [vmem:[%s338 + $0xe0] sm:$0xff] %v772
        %808 = vst [vmem:[%s338 + $0xe8] sm:$0xff] %v774
        %809 = vst [vmem:[%s338 + $0xf0] sm:$0xff] %v776
        %810 = vst [vmem:[%s338 + $0xf8] sm:$0xff] %v778
        %v811 = vld [vmem:[%s338] sm:$0xff]
        %v812 = vld [vmem:[%s338 + $0x8] sm:$0xff]
        %v813 = vld [vmem:[%s338 + $0x10] sm:$0xff]
        %v814 = vld [vmem:[%s338 + $0x18] sm:$0xff]
        %v815 = vld [vmem:[%s338 + $0x20] sm:$0xff]
        %v816 = vld [vmem:[%s338 + $0x28] sm:$0xff]
        %v817 = vld [vmem:[%s338 + $0x30] sm:$0xff]
        %v818 = vld [vmem:[%s338 + $0x38] sm:$0xff]
        %v819 = vld [vmem:[%s338 + $0x40] sm:$0xff]
        %v820 = vld [vmem:[%s338 + $0x48] sm:$0xff]
        %v821 = vld [vmem:[%s338 + $0x50] sm:$0xff]
        %v822 = vld [vmem:[%s338 + $0x58] sm:$0xff]
        %v823 = vld [vmem:[%s338 + $0x60] sm:$0xff]
        %v824 = vld [vmem:[%s338 + $0x68] sm:$0xff]
        %v825 = vld [vmem:[%s338 + $0x70] sm:$0xff]
        %v826 = vld [vmem:[%s338 + $0x78] sm:$0xff]
        %v827 = vld [vmem:[%s338 + $0x80] sm:$0xff]
        %v828 = vld [vmem:[%s338 + $0x88] sm:$0xff]
        %v829 = vld [vmem:[%s338 + $0x90] sm:$0xff]
        %v830 = vld [vmem:[%s338 + $0x98] sm:$0xff]
        %v831 = vld [vmem:[%s338 + $0xa0] sm:$0xff]
        %v832 = vld [vmem:[%s338 + $0xa8] sm:$0xff]
        %v833 = vld [vmem:[%s338 + $0xb0] sm:$0xff]
        %v834 = vld [vmem:[%s338 + $0xb8] sm:$0xff]
        %v835 = vld [vmem:[%s338 + $0xc0] sm:$0xff]
        %v836 = vld [vmem:[%s338 + $0xc8] sm:$0xff]
        %v837 = vld [vmem:[%s338 + $0xd0] sm:$0xff]
        %v838 = vld [vmem:[%s338 + $0xd8] sm:$0xff]
        %v839 = vld [vmem:[%s338 + $0xe0] sm:$0xff]
        %v840 = vld [vmem:[%s338 + $0xe8] sm:$0xff]
        %v841 = vld [vmem:[%s338 + $0xf0] sm:$0xff]
        %v842 = vld [vmem:[%s338 + $0xf8] sm:$0xff]
        %v843 = vadd.f32 %v811, %v812
        %844 = vadd.xlane.f32.xlu0 %v843
        %v845 = vpop.xlane.xlu0 %844
        %v846 = vadd.f32 %v813, %v814
        %847 = vadd.xlane.f32.xlu0 %v846
        %v848 = vpop.xlane.xlu0 %847
        %v849 = vadd.f32 %v815, %v816
        %850 = vadd.xlane.f32.xlu0 %v849
        %v851 = vpop.xlane.xlu0 %850
        %v852 = vadd.f32 %v817, %v818
        %853 = vadd.xlane.f32.xlu0 %v852
        %v854 = vpop.xlane.xlu0 %853
        %v855 = vadd.f32 %v819, %v820
        %856 = vadd.xlane.f32.xlu0 %v855
        %v857 = vpop.xlane.xlu0 %856
        %v858 = vadd.f32 %v821, %v822
        %859 = vadd.xlane.f32.xlu0 %v858
        %v860 = vpop.xlane.xlu0 %859
        %v861 = vadd.f32 %v823, %v824
        %862 = vadd.xlane.f32.xlu0 %v861
        %v863 = vpop.xlane.xlu0 %862
        %v864 = vadd.f32 %v825, %v826
        %865 = vadd.xlane.f32.xlu0 %v864
        %v866 = vpop.xlane.xlu0 %865
        %v867 = vadd.f32 %v827, %v828
        %868 = vadd.xlane.f32.xlu0 %v867
        %v869 = vpop.xlane.xlu0 %868
        %v870 = vadd.f32 %v829, %v830
        %871 = vadd.xlane.f32.xlu0 %v870
        %v872 = vpop.xlane.xlu0 %871
        %v873 = vadd.f32 %v831, %v832
        %874 = vadd.xlane.f32.xlu0 %v873
        %v875 = vpop.xlane.xlu0 %874
        %v876 = vadd.f32 %v833, %v834
        %877 = vadd.xlane.f32.xlu0 %v876
        %v878 = vpop.xlane.xlu0 %877
        %v879 = vadd.f32 %v835, %v836
        %880 = vadd.xlane.f32.xlu0 %v879
        %v881 = vpop.xlane.xlu0 %880
        %v882 = vadd.f32 %v837, %v838
        %883 = vadd.xlane.f32.xlu0 %v882
        %v884 = vpop.xlane.xlu0 %883
        %v885 = vadd.f32 %v839, %v840
        %886 = vadd.xlane.f32.xlu0 %v885
        %v887 = vpop.xlane.xlu0 %886
        %v888 = vadd.f32 %v841, %v842
        %889 = vadd.xlane.f32.xlu0 %v888
        %v890 = vpop.xlane.xlu0 %889
        %v891 = vrcp.pop %v845
        %v892 = vrcp.pop %v848
        %v893 = vrcp.pop %v851
        %v894 = vrcp.pop %v854
        %v895 = vrcp.pop %v857
        %v896 = vrcp.pop %v860
        %v897 = vrcp.pop %v863
        %v898 = vrcp.pop %v866
        %v899 = vrcp.pop %v869
        %v900 = vrcp.pop %v872
        %v901 = vrcp.pop %v875
        %v902 = vrcp.pop %v878
        %v903 = vrcp.pop %v881
        %v904 = vrcp.pop %v884
        %v905 = vrcp.pop %v887
        %v906 = vrcp.pop %v890
        %v907 = vmul.f32 %v811, %v891
        %v908 = vmul.f32 %v812, %v891
        %v909 = vmul.f32 %v813, %v892
        %v910 = vmul.f32 %v814, %v892
        %v911 = vmul.f32 %v815, %v893
        %v912 = vmul.f32 %v816, %v893
        %v913 = vmul.f32 %v817, %v894
        %v914 = vmul.f32 %v818, %v894
        %v915 = vmul.f32 %v819, %v895
        %v916 = vmul.f32 %v820, %v895
        %v917 = vmul.f32 %v821, %v896
        %v918 = vmul.f32 %v822, %v896
        %v919 = vmul.f32 %v823, %v897
        %v920 = vmul.f32 %v824, %v897
        %v921 = vmul.f32 %v825, %v898
        %v922 = vmul.f32 %v826, %v898
        %v923 = vmul.f32 %v827, %v899
        %v924 = vmul.f32 %v828, %v899
        %v925 = vmul.f32 %v829, %v900
        %v926 = vmul.f32 %v830, %v900
        %v927 = vmul.f32 %v831, %v901
        %v928 = vmul.f32 %v832, %v901
        %v929 = vmul.f32 %v833, %v902
        %v930 = vmul.f32 %v834, %v902
        %v931 = vmul.f32 %v835, %v903
        %v932 = vmul.f32 %v836, %v903
        %v933 = vmul.f32 %v837, %v904
        %v934 = vmul.f32 %v838, %v904
        %v935 = vmul.f32 %v839, %v905
        %v936 = vmul.f32 %v840, %v905
        %v937 = vmul.f32 %v841, %v906
        %v938 = vmul.f32 %v842, %v906
        %939 = vst [vmem:[%s338] sm:$0xff] %v907
        %940 = vst [vmem:[%s338 + $0x8] sm:$0xff] %v908
        %941 = vst [vmem:[%s338 + $0x10] sm:$0xff] %v909
        %942 = vst [vmem:[%s338 + $0x18] sm:$0xff] %v910
        %943 = vst [vmem:[%s338 + $0x20] sm:$0xff] %v911
        %944 = vst [vmem:[%s338 + $0x28] sm:$0xff] %v912
        %945 = vst [vmem:[%s338 + $0x30] sm:$0xff] %v913
        %946 = vst [vmem:[%s338 + $0x38] sm:$0xff] %v914
        %947 = vst [vmem:[%s338 + $0x40] sm:$0xff] %v915
        %948 = vst [vmem:[%s338 + $0x48] sm:$0xff] %v916
        %949 = vst [vmem:[%s338 + $0x50] sm:$0xff] %v917
        %950 = vst [vmem:[%s338 + $0x58] sm:$0xff] %v918
        %951 = vst [vmem:[%s338 + $0x60] sm:$0xff] %v919
        %952 = vst [vmem:[%s338 + $0x68] sm:$0xff] %v920
        %953 = vst [vmem:[%s338 + $0x70] sm:$0xff] %v921
        %954 = vst [vmem:[%s338 + $0x78] sm:$0xff] %v922
        %955 = vst [vmem:[%s338 + $0x80] sm:$0xff] %v923
        %956 = vst [vmem:[%s338 + $0x88] sm:$0xff] %v924
        %957 = vst [vmem:[%s338 + $0x90] sm:$0xff] %v925
        %958 = vst [vmem:[%s338 + $0x98] sm:$0xff] %v926
        %959 = vst [vmem:[%s338 + $0xa0] sm:$0xff] %v927
        %960 = vst [vmem:[%s338 + $0xa8] sm:$0xff] %v928
        %961 = vst [vmem:[%s338 + $0xb0] sm:$0xff] %v929
        %962 = vst [vmem:[%s338 + $0xb8] sm:$0xff] %v930
        %963 = vst [vmem:[%s338 + $0xc0] sm:$0xff] %v931
        %964 = vst [vmem:[%s338 + $0xc8] sm:$0xff] %v932
        %965 = vst [vmem:[%s338 + $0xd0] sm:$0xff] %v933
        %966 = vst [vmem:[%s338 + $0xd8] sm:$0xff] %v934
        %967 = vst [vmem:[%s338 + $0xe0] sm:$0xff] %v935
        %968 = vst [vmem:[%s338 + $0xe8] sm:$0xff] %v936
        %969 = vst [vmem:[%s338 + $0xf0] sm:$0xff] %v937
        %970 = vst [vmem:[%s338 + $0xf8] sm:$0xff] %v938
        %v971 = vld [vmem:[%s357] sm:$0xff]
        %v972 = vld [vmem:[%s357 + $0x8] sm:$0xff]
        %v973 = vld [vmem:[%s357 + $0x10] sm:$0xff]
        %v974 = vld [vmem:[%s357 + $0x18] sm:$0xff]
        %v975 = vld [vmem:[%s357 + $0x20] sm:$0xff]
        %v976 = vld [vmem:[%s357 + $0x28] sm:$0xff]
        %v977 = vld [vmem:[%s357 + $0x30] sm:$0xff]
        %v978 = vld [vmem:[%s357 + $0x38] sm:$0xff]
        %v979 = vld [vmem:[%s357 + $0x40] sm:$0xff]
        %v980 = vld [vmem:[%s357 + $0x48] sm:$0xff]
        %v981 = vld [vmem:[%s357 + $0x50] sm:$0xff]
        %v982 = vld [vmem:[%s357 + $0x58] sm:$0xff]
        %v983 = vld [vmem:[%s357 + $0x60] sm:$0xff]
        %v984 = vld [vmem:[%s357 + $0x68] sm:$0xff]
        %v985 = vld [vmem:[%s357 + $0x70] sm:$0xff]
        %v986 = vld [vmem:[%s357 + $0x78] sm:$0xff]
        %v987 = vld [vmem:[%s357 + $0x80] sm:$0xff]
        %v988 = vld [vmem:[%s357 + $0x88] sm:$0xff]
        %v989 = vld [vmem:[%s357 + $0x90] sm:$0xff]
        %v990 = vld [vmem:[%s357 + $0x98] sm:$0xff]
        %v991 = vld [vmem:[%s357 + $0xa0] sm:$0xff]
        %v992 = vld [vmem:[%s357 + $0xa8] sm:$0xff]
        %v993 = vld [vmem:[%s357 + $0xb0] sm:$0xff]
        %v994 = vld [vmem:[%s357 + $0xb8] sm:$0xff]
        %v995 = vld [vmem:[%s357 + $0xc0] sm:$0xff]
        %v996 = vld [vmem:[%s357 + $0xc8] sm:$0xff]
        %v997 = vld [vmem:[%s357 + $0xd0] sm:$0xff]
        %v998 = vld [vmem:[%s357 + $0xd8] sm:$0xff]
        %v999 = vld [vmem:[%s357 + $0xe0] sm:$0xff]
        %v1000 = vld [vmem:[%s357 + $0xe8] sm:$0xff]
        %v1001 = vld [vmem:[%s357 + $0xf0] sm:$0xff]
        %v1002 = vld [vmem:[%s357 + $0xf8] sm:$0xff]
        %1003 = vmatprep.subr.mxu0 0.0
        %1004 = vmatpush1.msra.mxu0 %v971
        %1005 = vmatprep.subr.mxu0 0.0
        %1006 = vmatpush1.msra.mxu0 %v972
        %1007 = vmatprep.subr.mxu0 0.0
        %1008 = vmatpush1.msra.mxu0 %v973
        %1009 = vmatprep.subr.mxu0 0.0
        %1010 = vmatpush1.msra.mxu0 %v974
        %1011 = vmatprep.subr.mxu0 0.0
        %1012 = vmatpush1.msra.mxu0 %v975
        %1013 = vmatprep.subr.mxu0 0.0
        %1014 = vmatpush1.msra.mxu0 %v976
        %1015 = vmatprep.subr.mxu0 0.0
        %1016 = vmatpush1.msra.mxu0 %v977
        %1017 = vmatprep.subr.mxu0 0.0
        %1018 = vmatpush1.msra.mxu0 %v978
        %1019 = vmatprep.subr.mxu0 0.0
        %1020 = vmatpush1.msra.mxu0 %v979
        %1021 = vmatprep.subr.mxu0 0.0
        %1022 = vmatpush1.msra.mxu0 %v980
        %1023 = vmatprep.subr.mxu0 0.0
        %1024 = vmatpush1.msra.mxu0 %v981
        %1025 = vmatprep.subr.mxu0 0.0
        %1026 = vmatpush1.msra.mxu0 %v982
        %1027 = vmatprep.subr.mxu0 0.0
        %1028 = vmatpush1.msra.mxu0 %v983
        %1029 = vmatprep.subr.mxu0 0.0
        %1030 = vmatpush1.msra.mxu0 %v984
        %1031 = vmatprep.subr.mxu0 0.0
        %1032 = vmatpush1.msra.mxu0 %v985
        %1033 = vmatprep.subr.mxu0 0.0
        %1034 = vmatpush1.msra.mxu0 %v986
        %1035 = vmatprep.subr.mxu0 0.0
        %1036 = vmatpush1.msra.mxu0 %v987
        %1037 = vmatprep.subr.mxu0 0.0
        %1038 = vmatpush1.msra.mxu0 %v988
        %1039 = vmatprep.subr.mxu0 0.0
        %1040 = vmatpush1.msra.mxu0 %v989
        %1041 = vmatprep.subr.mxu0 0.0
        %1042 = vmatpush1.msra.mxu0 %v990
        %1043 = vmatprep.subr.mxu0 0.0
        %1044 = vmatpush1.msra.mxu0 %v991
        %1045 = vmatprep.subr.mxu0 0.0
        %1046 = vmatpush1.msra.mxu0 %v992
        %1047 = vmatprep.subr.mxu0 0.0
        %1048 = vmatpush1.msra.mxu0 %v993
        %1049 = vmatprep.subr.mxu0 0.0
        %1050 = vmatpush1.msra.mxu0 %v994
        %1051 = vmatprep.subr.mxu0 0.0
        %1052 = vmatpush1.msra.mxu0 %v995
        %1053 = vmatprep.subr.mxu0 0.0
        %1054 = vmatpush1.msra.mxu0 %v996
        %1055 = vmatprep.subr.mxu0 0.0
        %1056 = vmatpush1.msra.mxu0 %v997
        %1057 = vmatprep.subr.mxu0 0.0
        %1058 = vmatpush1.msra.mxu0 %v998
        %1059 = vmatprep.subr.mxu0 0.0
        %1060 = vmatpush1.msra.mxu0 %v999
        %1061 = vmatprep.subr.mxu0 0.0
        %1062 = vmatpush1.msra.mxu0 %v1000
        %1063 = vmatprep.subr.mxu0 0.0
        %1064 = vmatpush1.msra.mxu0 %v1001
        %1065 = vmatprep.subr.mxu0 0.0
        %1066 = vmatpush1.msra.mxu0 %v1002
        %1067 = vmatprep.mubr.f32.mxu0 %v908
        %1068 = vmatmul.mubr.f32.gmra.mrb[0].mxu0 %v907
        %v1069 = vpop.f32.mrb[0].mxu0
        %v1070 = vadd.f32 0.0, %v1069
        %v1071 = vpop.f32.mrb[0].mxu0
        %1072 = vmatprep.mubr.f32.mxu0 %v910
        %1073 = vmatmul.mubr.f32.gmra.mrb[0].mxu0 %v909
        %v1074 = vpop.f32.mrb[0].mxu0
        %v1075 = vadd.f32 0.0, %v1074
        %v1076 = vpop.f32.mrb[0].mxu0
        %1077 = vmatprep.mubr.f32.mxu0 %v912
        %1078 = vmatmul.mubr.f32.gmra.mrb[0].mxu0 %v911
        %v1079 = vpop.f32.mrb[0].mxu0
        %v1080 = vadd.f32 0.0, %v1079
        %v1081 = vpop.f32.mrb[0].mxu0
        %1082 = vmatprep.mubr.f32.mxu0 %v914
        %1083 = vmatmul.mubr.f32.gmra.mrb[0].mxu0 %v913
        %v1084 = vpop.f32.mrb[0].mxu0
        %v1085 = vadd.f32 0.0, %v1084
        %v1086 = vpop.f32.mrb[0].mxu0
        %1087 = vmatprep.mubr.f32.mxu0 %v916
        %1088 = vmatmul.mubr.f32.gmra.mrb[0].mxu0 %v915
        %v1089 = vpop.f32.mrb[0].mxu0
        %v1090 = vadd.f32 0.0, %v1089
        %v1091 = vpop.f32.mrb[0].mxu0
        %1092 = vmatprep.mubr.f32.mxu0 %v918
        %1093 = vmatmul.mubr.f32.gmra.mrb[0].mxu0 %v917
        %v1094 = vpop.f32.mrb[0].mxu0
        %v1095 = vadd.f32 0.0, %v1094
        %v1096 = vpop.f32.mrb[0].mxu0
        %1097 = vmatprep.mubr.f32.mxu0 %v920
        %1098 = vmatmul.mubr.f32.gmra.mrb[0].mxu0 %v919
        %v1099 = vpop.f32.mrb[0].mxu0
        %v1100 = vadd.f32 0.0, %v1099
        %v1101 = vpop.f32.mrb[0].mxu0
        %1102 = vmatprep.mubr.f32.mxu0 %v922
        %1103 = vmatmul.mubr.f32.gmra.mrb[0].mxu0 %v921
        %v1104 = vpop.f32.mrb[0].mxu0
        %v1105 = vadd.f32 0.0, %v1104
        %v1106 = vpop.f32.mrb[0].mxu0
        %1107 = vmatprep.mubr.f32.mxu0 %v924
        %1108 = vmatmul.mubr.f32.gmra.mrb[0].mxu0 %v923
        %v1109 = vpop.f32.mrb[0].mxu0
        %v1110 = vadd.f32 0.0, %v1109
        %v1111 = vpop.f32.mrb[0].mxu0
        %1112 = vmatprep.mubr.f32.mxu0 %v926
        %1113 = vmatmul.mubr.f32.gmra.mrb[0].mxu0 %v925
        %v1114 = vpop.f32.mrb[0].mxu0
        %v1115 = vadd.f32 0.0, %v1114
        %v1116 = vpop.f32.mrb[0].mxu0
        %1117 = vmatprep.mubr.f32.mxu0 %v928
        %1118 = vmatmul.mubr.f32.gmra.mrb[0].mxu0 %v927
        %v1119 = vpop.f32.mrb[0].mxu0
        %v1120 = vadd.f32 0.0, %v1119
        %v1121 = vpop.f32.mrb[0].mxu0
        %1122 = vmatprep.mubr.f32.mxu0 %v930
        %1123 = vmatmul.mubr.f32.gmra.mrb[0].mxu0 %v929
        %v1124 = vpop.f32.mrb[0].mxu0
        %v1125 = vadd.f32 0.0, %v1124
        %v1126 = vpop.f32.mrb[0].mxu0
        %1127 = vmatprep.mubr.f32.mxu0 %v932
        %1128 = vmatmul.mubr.f32.gmra.mrb[0].mxu0 %v931
        %v1129 = vpop.f32.mrb[0].mxu0
        %v1130 = vadd.f32 0.0, %v1129
        %v1131 = vpop.f32.mrb[0].mxu0
        %1132 = vmatprep.mubr.f32.mxu0 %v934
        %1133 = vmatmul.mubr.f32.gmra.mrb[0].mxu0 %v933
        %v1134 = vpop.f32.mrb[0].mxu0
        %v1135 = vadd.f32 0.0, %v1134
        %v1136 = vpop.f32.mrb[0].mxu0
        %1137 = vmatprep.mubr.f32.mxu0 %v936
        %1138 = vmatmul.mubr.f32.gmra.mrb[0].mxu0 %v935
        %v1139 = vpop.f32.mrb[0].mxu0
        %v1140 = vadd.f32 0.0, %v1139
        %v1141 = vpop.f32.mrb[0].mxu0
        %1142 = vmatprep.mubr.f32.mxu0 %v938
        %1143 = vmatmul.mubr.f32.gmra.mrb[0].mxu0 %v937
        %v1144 = vpop.f32.mrb[0].mxu0
        %v1145 = vadd.f32 0.0, %v1144
        %v1146 = vpop.f32.mrb[0].mxu0
        %1147 = vdwg.mxu0
        %v1148 = vstv %s396
        %v1149 = vmul.f32 %v1148, %v1070
        %v1150 = vmul.f32 %v1148, %v1075
        %v1151 = vmul.f32 %v1148, %v1080
        %v1152 = vmul.f32 %v1148, %v1085
        %v1153 = vmul.f32 %v1148, %v1090
        %v1154 = vmul.f32 %v1148, %v1095
        %v1155 = vmul.f32 %v1148, %v1100
        %v1156 = vmul.f32 %v1148, %v1105
        %v1157 = vmul.f32 %v1148, %v1110
        %v1158 = vmul.f32 %v1148, %v1115
        %v1159 = vmul.f32 %v1148, %v1120
        %v1160 = vmul.f32 %v1148, %v1125
        %v1161 = vmul.f32 %v1148, %v1130
        %v1162 = vmul.f32 %v1148, %v1135
        %v1163 = vmul.f32 %v1148, %v1140
        %v1164 = vmul.f32 %v1148, %v1145
        %v1165 = vld [vmem:[%s366] sm:$0xff]
        %v1166 = vld [vmem:[%s366 + $0x8] sm:$0xff]
        %v1167 = vld [vmem:[%s366 + $0x10] sm:$0xff]
        %v1168 = vld [vmem:[%s366 + $0x18] sm:$0xff]
        %v1169 = vld [vmem:[%s366 + $0x20] sm:$0xff]
        %v1170 = vld [vmem:[%s366 + $0x28] sm:$0xff]
        %v1171 = vld [vmem:[%s366 + $0x30] sm:$0xff]
        %v1172 = vld [vmem:[%s366 + $0x38] sm:$0xff]
        %v1173 = vld [vmem:[%s366 + $0x40] sm:$0xff]
        %v1174 = vld [vmem:[%s366 + $0x48] sm:$0xff]
        %v1175 = vld [vmem:[%s366 + $0x50] sm:$0xff]
        %v1176 = vld [vmem:[%s366 + $0x58] sm:$0xff]
        %v1177 = vld [vmem:[%s366 + $0x60] sm:$0xff]
        %v1178 = vld [vmem:[%s366 + $0x68] sm:$0xff]
        %v1179 = vld [vmem:[%s366 + $0x70] sm:$0xff]
        %v1180 = vld [vmem:[%s366 + $0x78] sm:$0xff]
        %v1181 = vadd.f32 %v1149, %v1165
        %v1182 = vadd.f32 %v1150, %v1166
        %v1183 = vadd.f32 %v1151, %v1167
        %v1184 = vadd.f32 %v1152, %v1168
        %v1185 = vadd.f32 %v1153, %v1169
        %v1186 = vadd.f32 %v1154, %v1170
        %v1187 = vadd.f32 %v1155, %v1171
        %v1188 = vadd.f32 %v1156, %v1172
        %v1189 = vadd.f32 %v1157, %v1173
        %v1190 = vadd.f32 %v1158, %v1174
        %v1191 = vadd.f32 %v1159, %v1175
        %v1192 = vadd.f32 %v1160, %v1176
        %v1193 = vadd.f32 %v1161, %v1177
        %v1194 = vadd.f32 %v1162, %v1178
        %v1195 = vadd.f32 %v1163, %v1179
        %v1196 = vadd.f32 %v1164, %v1180
        %vm1197 = vcmask 31744
        %1198 = vst.msk [vmem:[%s376] sm:$0xff] %vm1197, %v1181
        %1199 = vst.msk [vmem:[%s376 + $0x8] sm:$0xff] %vm1197, %v1182
        %1200 = vst.msk [vmem:[%s376 + $0x10] sm:$0xff] %vm1197, %v1183
        %1201 = vst.msk [vmem:[%s376 + $0x18] sm:$0xff] %vm1197, %v1184
        %1202 = vst.msk [vmem:[%s376 + $0x20] sm:$0xff] %vm1197, %v1185
        %1203 = vst.msk [vmem:[%s376 + $0x28] sm:$0xff] %vm1197, %v1186
        %1204 = vst.msk [vmem:[%s376 + $0x30] sm:$0xff] %vm1197, %v1187
        %1205 = vst.msk [vmem:[%s376 + $0x38] sm:$0xff] %vm1197, %v1188
        %1206 = vst.msk [vmem:[%s376 + $0x40] sm:$0xff] %vm1197, %v1189
        %1207 = vst.msk [vmem:[%s376 + $0x48] sm:$0xff] %vm1197, %v1190
        %1208 = vst.msk [vmem:[%s376 + $0x50] sm:$0xff] %vm1197, %v1191
        %1209 = vst.msk [vmem:[%s376 + $0x58] sm:$0xff] %vm1197, %v1192
        %1210 = vst.msk [vmem:[%s376 + $0x60] sm:$0xff] %vm1197, %v1193
        %1211 = vst.msk [vmem:[%s376 + $0x68] sm:$0xff] %vm1197, %v1194
        %1212 = vst.msk [vmem:[%s376 + $0x70] sm:$0xff] %vm1197, %v1195
        %1213 = vst.msk [vmem:[%s376 + $0x78] sm:$0xff] %vm1197, %v1196
        %s1214 = smul.u32 16, %s27
        %p1215 = scmp.lt.s32.totalorder %s26, 1
        %s1216 = scalar_select %p1215, %s26, 1
        %p1217 = scmp.lt.s32.totalorder %s1214, 31
        %s1218 = scalar_select %p1217, %s1214, 31
        %s1219 = smul.addr %s1216, 32
        %s1220 = sadd.s32 %s1218, %s1219
        %s1221 = smul.addr %s1220, 8
        %s1222 = scalar_lea.vmem %s5, %s1221
        %s1223 = sand.u32 %s201, 1
        %s1224 = scalar_lea.sflag [#allocation4], %s1223
        %s1225 = sand.u32 %s201, 1
        %s1226 = smul.addr %s1225, 256
        %s1227 = scalar_lea.vmem [#allocation3], %s1226
        // Predicated region
        $region41: #{_self_attn_flat.1} parent=39 // pred_check
          %p1228 = pneg %p183
        $region42: #{_self_attn_flat.1} parent=39 // pred_check_branch
          %1230 = sbr.rel (%p1228) target = $region44
        $region43: #{_self_attn_flat.1} parent=39 // pred_region
          %s1231 = smul.u32 16, %s27
        $region44: #{_self_attn_flat.1} parent=39 // pred_fallthru
          _
        // Predicated region
        $region45: #{_self_attn_flat.1} parent=39 // pred_check
          %p1232 = pneg %p211
        $region46: #{_self_attn_flat.1} parent=39 // pred_check_branch
          %1234 = sbr.rel (%p1232) target = $region48
        $region47: #{_self_attn_flat.1} parent=39 // pred_region
          %s1235 = smul.u32 16, %s27
          %s1237 = ssub.s32 4096, 4096
          %1238 = vsyncadd %s1224, %s1237
          %s1239 = smul.addr %s1235, 2
          %s1240 = smul.addr %s26, 64
          %s1241 = sadd.s32 %s1239, %s1240
          %s1242 = smul.addr %s1241, 128
          %s1243 = scalar_lea.hbm %s6, %s1242
          %s1244 = sshll.u32 %s1227, 4
          %s1245 = int_to_ptr.vmem [resolvable:$true] %s1244
          %1250 = dma.vmem_to_hbm [thread:$0]  %s1245, 4096, %s1243, %s1224, 256, 256, 16
        $region48: #{_self_attn_flat.1} parent=39 // pred_fallthru
          _
      $region40: #{_self_attn_flat.1} parent=5 // pred_fallthru
        _
      %p1251 = scmp.le.s32.totalorder 2, %s17
      // Predicated region
      $region49: #{_self_attn_flat.1} parent=5 // pred_check
        %p1252 = pneg %p1251
      $region50: #{_self_attn_flat.1} parent=5 // pred_check_branch
        %1254 = sbr.rel (%p1252) target = $region52
      $region51: #{_self_attn_flat.1} parent=5 // pred_region
        %s1255 = ssub.s32 %s17, 2
        // Predicated region
        $region53: #{_self_attn_flat.1} parent=51 // pred_check
          %p1256 = pneg %p189
        $region54: #{_self_attn_flat.1} parent=51 // pred_check_branch
          %1258 = sbr.rel (%p1256) target = $region56
        $region55: #{_self_attn_flat.1} parent=51 // pred_region
          %s1259 = smul.u32 16, %s29
          %p1260 = scmp.lt.s32.totalorder %s28, 1
          %s1261 = scalar_select %p1260, %s28, 1
          %p1262 = scmp.lt.s32.totalorder %s1259, 31
          %s1263 = scalar_select %p1262, %s1259, 31
          %s1264 = smul.addr %s1261, 32
          %s1265 = sadd.s32 %s1263, %s1264
          %s1266 = smul.addr %s1265, 8
          %s1267 = scalar_lea.vmem %s5, %s1266
        $region56: #{_self_attn_flat.1} parent=51 // pred_fallthru
          _
        // Predicated region
        $region57: #{_self_attn_flat.1} parent=51 // pred_check
          %p1268 = pneg %p217
        $region58: #{_self_attn_flat.1} parent=51 // pred_check_branch
          %1270 = sbr.rel (%p1268) target = $region60
        $region59: #{_self_attn_flat.1} parent=51 // pred_region
          %s1271 = sand.u32 %s202, 1
          %s1272 = scalar_lea.sflag [#allocation4], %s1271
          %s1273 = sand.u32 %s202, 1
          %s1274 = smul.addr %s1273, 256
          %s1275 = scalar_lea.vmem [#allocation3], %s1274
          %1276 = dma.done %s1272, 4096
        $region60: #{_self_attn_flat.1} parent=51 // pred_fallthru
          _
      $region52: #{_self_attn_flat.1} parent=5 // pred_fallthru
        _
    $region6: #{_self_attn_flat.1} parent=1 // loop_footer
      %s21 = sadd.s32 1, %s17
    $region7: #{_self_attn_flat.1} parent=1 // loop_footer_branch
      %16 = sbr.rel target = $region3
    $region8: #{_self_attn_flat.1} parent=1 // loop_exit
      _
    %1277 = vsyncpa [#allocation4], 1
    %s1278 = scalar_lea.sflag [#allocation4], 1
    %1279 = vsyncpa %s1278, 1

</llo_original>
